<compile_context>
chip_gen: v7x
topology: tpu7x:2x2x1
jax: 0.10.0
libtpu: 0.0.40
codegen_flags: <defaults>
</compile_context>

<pallas_src>
import functools

import jax
import jax.numpy as jnp
from jax.experimental import pallas as pl
from jax.experimental.pallas import tpu as pltpu

NEG_SLOPE = 0.2  # GATConv default leaky_relu negative slope

# ---------------- packed weight slab layout (bf16, 256 lanes wide) ----------------
W_LANES = 256
R_WGAT, NR_WGAT = 0, 16       # (16, 64)   GAT lin, K padded 9->16
R_ATT,  NR_ATT  = 16, 64      # (64, 2)    columns: [att_dst | att_src]
R_W1,   NR_W1   = 80, 64      # (64, 128)  fc_input1
R_W2,   NR_W2   = 144, 64     # (64, 64)   fc_input2, K padded 34->64
R_WH1G, NR_WH1G = 208, 128    # (128, 256) [wv1_graph | wa1_graph]
R_WH1A, NR_WH1A = 336, 64     # (64, 256)  [wv1_agent | wa1_agent]
R_WH2,  NR_WH2  = 400, 256    # (256, 128) block-diag head: col0 = value, cols 1..A = advantage
W_ROWS = R_WH2 + NR_WH2       # 656 (multiple of 16 -> bf16 sublane aligned)

# ---------------- packed bias slab layout (f32, 128-aligned offsets) ----------------
B_LANES = 768
O_BGAT = 0     # 64 lanes
O_B1   = 128   # 128 lanes
O_B2   = 256   # 64 lanes
O_BH1  = 384   # 256 lanes  [bv1 | ba1]
O_BH2  = 640   # 128 lanes  [bv2 | ba2 | 0...]


def dueling_dqn_kernel(c_ref, x_ref, adj_ref, eattr_ref, pool_ref, agent_ref,
                       w_ref, b_ref, q_ref, *, num_actions):
    f32 = jnp.float32
    bf16 = jnp.bfloat16

    # ---- GATConv(9->64, heads=1, edge_dim=1) on dense adjacency ----
    x = x_ref[...].astype(bf16)                                   # (N, 16), zero-padded K
    wgat = w_ref[R_WGAT:R_WGAT + NR_WGAT, 0:64]                   # bf16 (16, 64)
    h = jnp.dot(x, wgat, preferred_element_type=f32)              # (N, 64) f32
    h_bf = h.astype(bf16)

    # attention projections on the MXU: one matmul instead of two lane-reductions
    att_both = w_ref[R_ATT:R_ATT + NR_ATT, 0:2]                   # (64, 2) [dst | src]
    hb = jnp.dot(h_bf, att_both, preferred_element_type=f32)      # (N, 2)
    a_dst = hb[:, 0:1]                                            # (N, 1)
    a_src = hb[:, 1]                                              # (N,)

    c_edge = c_ref[0, 0]                                          # SMEM scalar (precomputed)
    scores = a_dst + a_src[None, :] + c_edge * eattr_ref[...]     # (N, N) f32
    scores = jnp.where(scores > 0, scores, NEG_SLOPE * scores)    # leaky_relu (f32, VPU)
    masked = jnp.where(adj_ref[...] > 0, scores, -1e30)           # keep sentinel in f32

    m = jnp.max(masked, axis=-1, keepdims=True)
    p = jnp.exp(masked - m)
    denom = jnp.sum(p, axis=-1, keepdims=True)
    attn = p * pl.reciprocal(denom, approx=True)                  # EUP reciprocal

    b_gat = b_ref[0:1, O_BGAT:O_BGAT + 64]
    gat = jnp.dot(attn.astype(bf16), h_bf, preferred_element_type=f32) + b_gat   # (N, 64)

    # ---- fc_input1: Linear(64,128) + ReLU ----
    w1 = w_ref[R_W1:R_W1 + NR_W1, 0:128]
    b1 = b_ref[0:1, O_B1:O_B1 + 128]
    f1 = jnp.maximum(jnp.dot(gat.astype(bf16), w1, preferred_element_type=f32) + b1, 0.0)  # (N, 128)

    # ---- global_mean_pool: (B, N) @ (N, 128) with 1/count weights ----
    pooled = jnp.dot(pool_ref[...].astype(bf16), f1.astype(bf16),
                     preferred_element_type=f32)                  # (B, 128)

    # ---- fc_input2: Linear(34,64) + ReLU (K zero-padded to 64) ----
    w2 = w_ref[R_W2:R_W2 + NR_W2, 0:64]
    b2 = b_ref[0:1, O_B2:O_B2 + 64]
    agent_h = jnp.maximum(jnp.dot(agent_ref[...].astype(bf16), w2,
                                  preferred_element_type=f32) + b2, 0.0)          # (B, 64)

    # ---- fused value/advantage hidden layer: one (B, 256) slab ----
    wh1g = w_ref[R_WH1G:R_WH1G + NR_WH1G, 0:256]
    wh1a = w_ref[R_WH1A:R_WH1A + NR_WH1A, 0:256]
    bh1 = b_ref[0:1, O_BH1:O_BH1 + 256]
    hidden = jnp.maximum(
        jnp.dot(pooled.astype(bf16), wh1g, preferred_element_type=f32)
        + jnp.dot(agent_h.astype(bf16), wh1a, preferred_element_type=f32)
        + bh1, 0.0)                                               # (B, 256) = [vh | ah]

    # ---- fused head: block-diagonal (256, 128) -> [value | advantage | 0...] ----
    wh2 = w_ref[R_WH2:R_WH2 + NR_WH2, 0:128]
    bh2 = b_ref[0:1, O_BH2:O_BH2 + 128]
    head = jnp.dot(hidden.astype(bf16), wh2, preferred_element_type=f32) + bh2    # (B, 128)

    value = head[:, 0:1]
    adv = head[:, 1:1 + num_actions]
    q_ref[...] = value + adv - jnp.sum(adv, axis=-1, keepdims=True) * (1.0 / num_actions)


def dueling_dqn_forward(x, adj, eattr, pool_mat, agent_state, packed, num_actions):
    B = pool_mat.shape[0]
    # zero-pad contraction dims for aligned tiles (matches padded weight slab rows)
    x_pad = jnp.pad(x, ((0, 0), (0, 16 - x.shape[1])))
    agent_pad = jnp.pad(agent_state, ((0, 0), (0, 64 - agent_state.shape[1])))

    vmem = pl.BlockSpec(memory_space=pltpu.MemorySpace.VMEM)
    smem = pl.BlockSpec(memory_space=pltpu.MemorySpace.SMEM)
    kernel = functools.partial(dueling_dqn_kernel, num_actions=num_actions)

    return pl.pallas_call(
        kernel,
        out_shape=jax.ShapeDtypeStruct((B, num_actions), jnp.float32),
        in_specs=[smem, vmem, vmem, vmem, vmem, vmem, vmem, vmem],
        out_specs=vmem,
    )(packed["c_edge"], x_pad, adj, eattr, pool_mat, agent_pad,
      packed["w_slab"], packed["b_slab"])


# ---------------------------------------------------------------------------
# Parameter init (xavier_uniform weights, zero biases) + packing into slabs.
# ---------------------------------------------------------------------------
def xavier_uniform(key, fan_in, fan_out):
    bound = jnp.sqrt(6.0 / (fan_in + fan_out))
    return jax.random.uniform(key, (fan_in, fan_out), jnp.float32, -bound, bound)


def init_params(key, num_actions):
    ks = jax.random.split(key, 16)
    p = {}
    # GATConv(9, 64, edge_dim=1), heads=1
    p["wgat"] = xavier_uniform(ks[0], 9, 64)
    p["att_src"] = xavier_uniform(ks[1], 1, 64)
    p["att_dst"] = xavier_uniform(ks[2], 1, 64)
    p["w_edge"] = xavier_uniform(ks[3], 1, 64)
    p["att_edge"] = xavier_uniform(ks[4], 1, 64)
    p["b_gat"] = jnp.zeros((1, 64), jnp.float32)
    # fc_input1: Linear(64, 128)
    p["w1"] = xavier_uniform(ks[5], 64, 128)
    p["b1"] = jnp.zeros((1, 128), jnp.float32)
    # fc_input2: Linear(34, 64)
    p["w2"] = xavier_uniform(ks[6], 34, 64)
    p["b2"] = jnp.zeros((1, 64), jnp.float32)
    # value stream: Linear(192, 128) split [128 graph | 64 agent], Linear(128, 1)
    wv1 = xavier_uniform(ks[7], 192, 128)
    p["wv1g"], p["wv1a"] = wv1[:128], wv1[128:]
    p["bv1"] = jnp.zeros((1, 128), jnp.float32)
    p["wv2"] = xavier_uniform(ks[8], 128, 1)
    p["bv2"] = jnp.zeros((1, 1), jnp.float32)
    # advantage stream: Linear(192, 128), Linear(128, num_actions)
    wa1 = xavier_uniform(ks[9], 192, 128)
    p["wa1g"], p["wa1a"] = wa1[:128], wa1[128:]
    p["ba1"] = jnp.zeros((1, 128), jnp.float32)
    p["wa2"] = xavier_uniform(ks[10], 128, num_actions)
    p["ba2"] = jnp.zeros((1, num_actions), jnp.float32)
    return p


def pack_params(p, num_actions):
    assert 1 + num_actions <= 128
    def place(slab, r, m):
        return slab.at[r:r + m.shape[0], 0:m.shape[1]].set(m)

    w = jnp.zeros((W_ROWS, W_LANES), jnp.float32)
    w = place(w, R_WGAT, jnp.pad(p["wgat"], ((0, 16 - 9), (0, 0))))
    att_both = jnp.concatenate([p["att_dst"].T, p["att_src"].T], axis=1)   # (64, 2)
    w = place(w, R_ATT, att_both)
    w = place(w, R_W1, p["w1"])
    w = place(w, R_W2, jnp.pad(p["w2"], ((0, 64 - 34), (0, 0))))
    w = place(w, R_WH1G, jnp.concatenate([p["wv1g"], p["wa1g"]], axis=1))  # (128, 256)
    w = place(w, R_WH1A, jnp.concatenate([p["wv1a"], p["wa1a"]], axis=1))  # (64, 256)
    wh2 = jnp.zeros((256, 128), jnp.float32)
    wh2 = wh2.at[0:128, 0:1].set(p["wv2"])
    wh2 = wh2.at[128:256, 1:1 + num_actions].set(p["wa2"])
    w = place(w, R_WH2, wh2)

    b = jnp.zeros((1, B_LANES), jnp.float32)
    b = b.at[0:1, O_BGAT:O_BGAT + 64].set(p["b_gat"])
    b = b.at[0:1, O_B1:O_B1 + 128].set(p["b1"])
    b = b.at[0:1, O_B2:O_B2 + 64].set(p["b2"])
    b = b.at[0:1, O_BH1:O_BH1 + 256].set(jnp.concatenate([p["bv1"], p["ba1"]], axis=1))
    b = b.at[0:1, O_BH2:O_BH2 + 1].set(p["bv2"])
    b = b.at[0:1, O_BH2 + 1:O_BH2 + 1 + num_actions].set(p["ba2"])

    c_edge = jnp.sum(p["w_edge"] * p["att_edge"]).reshape(1, 1)   # precomputed constant

    return {"w_slab": w.astype(jnp.bfloat16), "b_slab": b, "c_edge": c_edge}


# ---------------------------------------------------------------------------
# Glue: densify the sparse graph (edge_index/edge_attr + self loops) and build
# the global_mean_pool matrix. Self-loop fill uses the per-destination mean of
# incoming edge attrs (PyG GATConv add_self_loops=True, fill_value='mean').
# ---------------------------------------------------------------------------
def densify_graph(num_nodes, edge_index, edge_attr, pool_batch, num_graphs):
    src, dst = edge_index[0], edge_index[1]
    adj = jnp.zeros((num_nodes, num_nodes), jnp.float32).at[dst, src].set(1.0)
    eattr = jnp.zeros((num_nodes, num_nodes), jnp.float32).at[dst, src].set(edge_attr[:, 0])
    # per-destination mean of incoming edge attrs for the self-loop fill
    deg = jnp.zeros((num_nodes,), jnp.float32).at[dst].add(1.0)
    attr_sum = jnp.zeros((num_nodes,), jnp.float32).at[dst].add(edge_attr[:, 0])
    fill = attr_sum / jnp.maximum(deg, 1.0)
    diag = jnp.arange(num_nodes)
    adj = adj.at[diag, diag].set(1.0)
    eattr = eattr.at[diag, diag].set(fill)
    # pooling matrix: pool[b, n] = 1/count_b if node n belongs to graph b
    onehot = (pool_batch[None, :] == jnp.arange(num_graphs)[:, None]).astype(jnp.float32)
    counts = jnp.sum(onehot, axis=1, keepdims=True)
    pool_mat = onehot / jnp.maximum(counts, 1.0)
    return adj, eattr, pool_mat


# Pure-JAX reference that mirrors the kernel's bf16-at-dot-boundary casts
# (so the numerical comparison is apples-to-apples).
def reference_forward(x, adj, eattr, pool_mat, agent_state, p):
    bf = jnp.bfloat16
    def bdot(a, b):
        return jnp.dot(a.astype(bf), b.astype(bf), preferred_element_type=jnp.float32)

    h = bdot(x, p["wgat"])
    att_both = jnp.concatenate([p["att_dst"].T, p["att_src"].T], axis=1)
    hb = bdot(h, att_both)
    a_dst, a_src = hb[:, 0:1], hb[:, 1]
    c_edge = jnp.sum(p["w_edge"] * p["att_edge"])
    s = a_dst + a_src[None, :] + c_edge * eattr
    s = jnp.where(s > 0, s, NEG_SLOPE * s)
    s = jnp.where(adj > 0, s, -1e30)
    attn = jax.nn.softmax(s, axis=-1)
    gat = bdot(attn, h) + p["b_gat"]
    f1 = jax.nn.relu(bdot(gat, p["w1"]) + p["b1"])
    pooled = bdot(pool_mat, f1)
    agent_h = jax.nn.relu(bdot(agent_state, p["w2"]) + p["b2"])
    vh = jax.nn.relu(bdot(pooled, p["wv1g"]) + bdot(agent_h, p["wv1a"]) + p["bv1"])
    value = bdot(vh, p["wv2"]) + p["bv2"]
    ah = jax.nn.relu(bdot(pooled, p["wa1g"]) + bdot(agent_h, p["wa1a"]) + p["ba1"])
    adv = bdot(ah, p["wa2"]) + p["ba2"]
    return value + adv - jnp.mean(adv, axis=-1, keepdims=True)


if __name__ == "__main__":
    key = jax.random.PRNGKey(0)
    k_x, k_e, k_a, k_p = jax.random.split(key, 4)

    NUM_ACTIONS = 4
    NUM_GRAPHS = 2            # batch of 2 graphs
    NODES_PER_GRAPH = 8
    N = NUM_GRAPHS * NODES_PER_GRAPH   # 16 nodes total

    # node features (N, 9), agent state (B, 34)
    x = jax.random.normal(k_x, (N, 9), jnp.float32)
    agent_state = jax.random.normal(k_a, (NUM_GRAPHS, 34), jnp.float32)

    # deterministic edge structure: within each graph, i -> i+1 and i -> i+2 (ring)
    src_list, dst_list = [], []
    for g in range(NUM_GRAPHS):
        base = g * NODES_PER_GRAPH
        for i in range(NODES_PER_GRAPH):
            for off in (1, 2):
                src_list.append(base + i)
                dst_list.append(base + (i + off) % NODES_PER_GRAPH)
    edge_index = jnp.array([src_list, dst_list], dtype=jnp.int32)       # (2, 32)
    E = edge_index.shape[1]
    edge_attr = jax.random.normal(k_e, (E, 1), jnp.float32)             # edge_dim = 1
    pool_batch = jnp.repeat(jnp.arange(NUM_GRAPHS, dtype=jnp.int32), NODES_PER_GRAPH)

    adj, eattr, pool_mat = densify_graph(N, edge_index, edge_attr, pool_batch, NUM_GRAPHS)
    raw_params = init_params(k_p, NUM_ACTIONS)
    packed = pack_params(raw_params, NUM_ACTIONS)

    q = dueling_dqn_forward(x, adj, eattr, pool_mat, agent_state, packed, NUM_ACTIONS)
    q = jax.block_until_ready(q)

    q_ref = reference_forward(x, adj, eattr, pool_mat, agent_state, raw_params)
    assert q.shape == (NUM_GRAPHS, NUM_ACTIONS)
    assert jnp.allclose(q, q_ref, atol=2e-2, rtol=2e-2), (q, q_ref)

    print("KERNEL_OK")
</pallas_src>

<mosaic_0001>
module attributes {stable_mosaic.version = 11 : i64} {
  func.func @dueling_dqn_kernel(%arg0: memref<1x1xf32, #tpu.memory_space<smem>>, %arg1: memref<16x16xf32, #tpu.memory_space<vmem>>, %arg2: memref<16x16xf32, #tpu.memory_space<vmem>>, %arg3: memref<16x16xf32, #tpu.memory_space<vmem>>, %arg4: memref<2x16xf32, #tpu.memory_space<vmem>>, %arg5: memref<2x64xf32, #tpu.memory_space<vmem>>, %arg6: memref<656x256xbf16, #tpu.memory_space<vmem>>, %arg7: memref<1x768xf32, #tpu.memory_space<vmem>>, %arg8: memref<2x4xf32, #tpu.memory_space<vmem>>) attributes {dimension_semantics = [], scalar_prefetch = 0 : i64, scratch_operands = 0 : i64, tpu.core_type = #tpu.core_type<tc>} {
    %c0 = arith.constant 0 : index
    %c0_0 = arith.constant 0 : index
    %0 = vector.load %arg1[%c0, %c0_0] : memref<16x16xf32, #tpu.memory_space<vmem>>, vector<16x16xf32>
    %1 = arith.truncf %0 : vector<16x16xf32> to vector<16x16xbf16>
    %c0_1 = arith.constant 0 : index
    %c0_2 = arith.constant 0 : index
    %2 = vector.load %arg6[%c0_1, %c0_2] : memref<656x256xbf16, #tpu.memory_space<vmem>>, vector<16x64xbf16>
    %cst = arith.constant dense<0.000000e+00> : vector<16x64xf32>
    %3 = tpu.matmul %1, %2, %cst {dimension_numbers = #tpu.dot_dimension_numbers<[1], [0], [0], [1], [0, 0, 1, 1], [], []>} : vector<16x16xbf16>, vector<16x64xbf16>, vector<16x64xf32> -> vector<16x64xf32>
    %4 = arith.truncf %3 : vector<16x64xf32> to vector<16x64xbf16>
    %c16 = arith.constant 16 : index
    %c0_3 = arith.constant 0 : index
    %5 = vector.load %arg6[%c16, %c0_3] : memref<656x256xbf16, #tpu.memory_space<vmem>>, vector<64x2xbf16>
    %cst_4 = arith.constant dense<0.000000e+00> : vector<16x2xf32>
    %6 = tpu.matmul %4, %5, %cst_4 {dimension_numbers = #tpu.dot_dimension_numbers<[1], [0], [0], [1], [0, 0, 1, 1], [], []>} : vector<16x64xbf16>, vector<64x2xbf16>, vector<16x2xf32> -> vector<16x2xf32>
    %7 = vector.extract_strided_slice %6 {offsets = [0, 0], sizes = [16, 1], strides = [1, 1]} : vector<16x2xf32> to vector<16x1xf32>
    %8 = vector.extract_strided_slice %6 {offsets = [0, 1], sizes = [16, 1], strides = [1, 1]} : vector<16x2xf32> to vector<16x1xf32>
    %9 = vector.shape_cast %8 : vector<16x1xf32> to vector<16xf32>
    %c0_5 = arith.constant 0 : index
    %c0_6 = arith.constant 0 : index
    %10 = memref.load %arg0[%c0_5, %c0_6] : memref<1x1xf32, #tpu.memory_space<smem>>
    %11 = vector.shape_cast %9 : vector<16xf32> to vector<1x16xf32>
    %12 = vector.broadcast %7 : vector<16x1xf32> to vector<16x16xf32>
    %13 = vector.broadcast %11 : vector<1x16xf32> to vector<16x16xf32>
    %14 = arith.addf %12, %13 : vector<16x16xf32>
    %c0_7 = arith.constant 0 : index
    %c0_8 = arith.constant 0 : index
    %15 = vector.load %arg3[%c0_7, %c0_8] : memref<16x16xf32, #tpu.memory_space<vmem>>, vector<16x16xf32>
    %16 = vector.broadcast %10 : f32 to vector<16x16xf32>
    %17 = arith.mulf %16, %15 : vector<16x16xf32>
    %18 = arith.addf %14, %17 : vector<16x16xf32>
    %cst_9 = arith.constant 0.000000e+00 : f32
    %19 = vector.broadcast %cst_9 : f32 to vector<16x16xf32>
    %20 = arith.cmpf ogt, %18, %19 : vector<16x16xf32>
    %cst_10 = arith.constant 2.000000e-01 : f32
    %21 = vector.broadcast %cst_10 : f32 to vector<16x16xf32>
    %22 = arith.mulf %21, %18 : vector<16x16xf32>
    %23 = arith.select %20, %18, %22 : vector<16x16xi1>, vector<16x16xf32>
    %c0_11 = arith.constant 0 : index
    %c0_12 = arith.constant 0 : index
    %24 = vector.load %arg2[%c0_11, %c0_12] : memref<16x16xf32, #tpu.memory_space<vmem>>, vector<16x16xf32>
    %cst_13 = arith.constant 0.000000e+00 : f32
    %25 = vector.broadcast %cst_13 : f32 to vector<16x16xf32>
    %26 = arith.cmpf ogt, %24, %25 : vector<16x16xf32>
    %cst_14 = arith.constant -1.000000e+30 : f32
    %27 = vector.broadcast %cst_14 : f32 to vector<16x16xf32>
    %28 = arith.select %26, %23, %27 : vector<16x16xi1>, vector<16x16xf32>
    %cst_15 = arith.constant dense<0xFF800000> : vector<16xf32>
    %29 = vector.multi_reduction <maximumf>, %28, %cst_15 [1] : vector<16x16xf32> to vector<16xf32>
    %30 = vector.shape_cast %29 : vector<16xf32> to vector<16x1xf32>
    %31 = vector.broadcast %30 : vector<16x1xf32> to vector<16x16xf32>
    %32 = arith.subf %28, %31 : vector<16x16xf32>
    %33 = math.exp %32 : vector<16x16xf32>
    %cst_16 = arith.constant dense<0.000000e+00> : vector<16xf32>
    %34 = vector.multi_reduction <add>, %33, %cst_16 [1] : vector<16x16xf32> to vector<16xf32>
    %35 = vector.shape_cast %34 : vector<16xf32> to vector<16x1xf32>
    %36 = tpu.reciprocal %35 {approx = true} : vector<16x1xf32> -> vector<16x1xf32>
    %37 = vector.broadcast %36 : vector<16x1xf32> to vector<16x16xf32>
    %38 = arith.mulf %33, %37 : vector<16x16xf32>
    %c0_17 = arith.constant 0 : index
    %c0_18 = arith.constant 0 : index
    %39 = vector.load %arg7[%c0_17, %c0_18] : memref<1x768xf32, #tpu.memory_space<vmem>>, vector<1x64xf32>
    %40 = arith.truncf %38 : vector<16x16xf32> to vector<16x16xbf16>
    %cst_19 = arith.constant dense<0.000000e+00> : vector<16x64xf32>
    %41 = tpu.matmul %40, %4, %cst_19 {dimension_numbers = #tpu.dot_dimension_numbers<[1], [0], [0], [1], [0, 0, 1, 1], [], []>} : vector<16x16xbf16>, vector<16x64xbf16>, vector<16x64xf32> -> vector<16x64xf32>
    %42 = vector.broadcast %39 : vector<1x64xf32> to vector<16x64xf32>
    %43 = arith.addf %41, %42 : vector<16x64xf32>
    %c80 = arith.constant 80 : index
    %c0_20 = arith.constant 0 : index
    %44 = vector.load %arg6[%c80, %c0_20] : memref<656x256xbf16, #tpu.memory_space<vmem>>, vector<64x128xbf16>
    %c0_21 = arith.constant 0 : index
    %c128 = arith.constant 128 : index
    %45 = vector.load %arg7[%c0_21, %c128] : memref<1x768xf32, #tpu.memory_space<vmem>>, vector<1x128xf32>
    %46 = arith.truncf %43 : vector<16x64xf32> to vector<16x64xbf16>
    %cst_22 = arith.constant dense<0.000000e+00> : vector<16x128xf32>
    %47 = tpu.matmul %46, %44, %cst_22 {dimension_numbers = #tpu.dot_dimension_numbers<[1], [0], [0], [1], [0, 0, 1, 1], [], []>} : vector<16x64xbf16>, vector<64x128xbf16>, vector<16x128xf32> -> vector<16x128xf32>
    %48 = vector.broadcast %45 : vector<1x128xf32> to vector<16x128xf32>
    %49 = arith.addf %47, %48 : vector<16x128xf32>
    %cst_23 = arith.constant 0.000000e+00 : f32
    %50 = vector.broadcast %cst_23 : f32 to vector<16x128xf32>
    %51 = arith.maximumf %49, %50 : vector<16x128xf32>
    %c0_24 = arith.constant 0 : index
    %c0_25 = arith.constant 0 : index
    %52 = vector.load %arg4[%c0_24, %c0_25] : memref<2x16xf32, #tpu.memory_space<vmem>>, vector<2x16xf32>
    %53 = arith.truncf %52 : vector<2x16xf32> to vector<2x16xbf16>
    %54 = arith.truncf %51 : vector<16x128xf32> to vector<16x128xbf16>
    %cst_26 = arith.constant dense<0.000000e+00> : vector<2x128xf32>
    %55 = tpu.matmul %53, %54, %cst_26 {dimension_numbers = #tpu.dot_dimension_numbers<[1], [0], [0], [1], [0, 0, 1, 1], [], []>} : vector<2x16xbf16>, vector<16x128xbf16>, vector<2x128xf32> -> vector<2x128xf32>
    %c144 = arith.constant 144 : index
    %c0_27 = arith.constant 0 : index
    %56 = vector.load %arg6[%c144, %c0_27] : memref<656x256xbf16, #tpu.memory_space<vmem>>, vector<64x64xbf16>
    %c0_28 = arith.constant 0 : index
    %c256 = arith.constant 256 : index
    %57 = vector.load %arg7[%c0_28, %c256] : memref<1x768xf32, #tpu.memory_space<vmem>>, vector<1x64xf32>
    %c0_29 = arith.constant 0 : index
    %c0_30 = arith.constant 0 : index
    %58 = vector.load %arg5[%c0_29, %c0_30] : memref<2x64xf32, #tpu.memory_space<vmem>>, vector<2x64xf32>
    %59 = arith.truncf %58 : vector<2x64xf32> to vector<2x64xbf16>
    %cst_31 = arith.constant dense<0.000000e+00> : vector<2x64xf32>
    %60 = tpu.matmul %59, %56, %cst_31 {dimension_numbers = #tpu.dot_dimension_numbers<[1], [0], [0], [1], [0, 0, 1, 1], [], []>} : vector<2x64xbf16>, vector<64x64xbf16>, vector<2x64xf32> -> vector<2x64xf32>
    %61 = vector.broadcast %57 : vector<1x64xf32> to vector<2x64xf32>
    %62 = arith.addf %60, %61 : vector<2x64xf32>
    %cst_32 = arith.constant 0.000000e+00 : f32
    %63 = vector.broadcast %cst_32 : f32 to vector<2x64xf32>
    %64 = arith.maximumf %62, %63 : vector<2x64xf32>
    %c208 = arith.constant 208 : index
    %c0_33 = arith.constant 0 : index
    %65 = vector.load %arg6[%c208, %c0_33] : memref<656x256xbf16, #tpu.memory_space<vmem>>, vector<128x256xbf16>
    %c336 = arith.constant 336 : index
    %c0_34 = arith.constant 0 : index
    %66 = vector.load %arg6[%c336, %c0_34] : memref<656x256xbf16, #tpu.memory_space<vmem>>, vector<64x256xbf16>
    %c0_35 = arith.constant 0 : index
    %c384 = arith.constant 384 : index
    %67 = vector.load %arg7[%c0_35, %c384] : memref<1x768xf32, #tpu.memory_space<vmem>>, vector<1x256xf32>
    %68 = arith.truncf %55 : vector<2x128xf32> to vector<2x128xbf16>
    %cst_36 = arith.constant dense<0.000000e+00> : vector<2x256xf32>
    %69 = tpu.matmul %68, %65, %cst_36 {dimension_numbers = #tpu.dot_dimension_numbers<[1], [0], [0], [1], [0, 0, 1, 1], [], []>} : vector<2x128xbf16>, vector<128x256xbf16>, vector<2x256xf32> -> vector<2x256xf32>
    %70 = arith.truncf %64 : vector<2x64xf32> to vector<2x64xbf16>
    %cst_37 = arith.constant dense<0.000000e+00> : vector<2x256xf32>
    %71 = tpu.matmul %70, %66, %cst_37 {dimension_numbers = #tpu.dot_dimension_numbers<[1], [0], [0], [1], [0, 0, 1, 1], [], []>} : vector<2x64xbf16>, vector<64x256xbf16>, vector<2x256xf32> -> vector<2x256xf32>
    %72 = arith.addf %69, %71 : vector<2x256xf32>
    %73 = vector.broadcast %67 : vector<1x256xf32> to vector<2x256xf32>
    %74 = arith.addf %72, %73 : vector<2x256xf32>
    %cst_38 = arith.constant 0.000000e+00 : f32
    %75 = vector.broadcast %cst_38 : f32 to vector<2x256xf32>
    %76 = arith.maximumf %74, %75 : vector<2x256xf32>
    %c400 = arith.constant 400 : index
    %c0_39 = arith.constant 0 : index
    %77 = vector.load %arg6[%c400, %c0_39] : memref<656x256xbf16, #tpu.memory_space<vmem>>, vector<256x128xbf16>
    %c0_40 = arith.constant 0 : index
    %c640 = arith.constant 640 : index
    %78 = vector.load %arg7[%c0_40, %c640] : memref<1x768xf32, #tpu.memory_space<vmem>>, vector<1x128xf32>
    %79 = arith.truncf %76 : vector<2x256xf32> to vector<2x256xbf16>
    %cst_41 = arith.constant dense<0.000000e+00> : vector<2x128xf32>
    %80 = tpu.matmul %79, %77, %cst_41 {dimension_numbers = #tpu.dot_dimension_numbers<[1], [0], [0], [1], [0, 0, 1, 1], [], []>} : vector<2x256xbf16>, vector<256x128xbf16>, vector<2x128xf32> -> vector<2x128xf32>
    %81 = vector.broadcast %78 : vector<1x128xf32> to vector<2x128xf32>
    %82 = arith.addf %80, %81 : vector<2x128xf32>
    %83 = vector.extract_strided_slice %82 {offsets = [0, 0], sizes = [2, 1], strides = [1, 1]} : vector<2x128xf32> to vector<2x1xf32>
    %84 = vector.extract_strided_slice %82 {offsets = [0, 1], sizes = [2, 4], strides = [1, 1]} : vector<2x128xf32> to vector<2x4xf32>
    %85 = vector.broadcast %83 : vector<2x1xf32> to vector<2x4xf32>
    %86 = arith.addf %85, %84 : vector<2x4xf32>
    %cst_42 = arith.constant dense<0.000000e+00> : vector<2xf32>
    %87 = vector.multi_reduction <add>, %84, %cst_42 [1] : vector<2x4xf32> to vector<2xf32>
    %88 = vector.shape_cast %87 : vector<2xf32> to vector<2x1xf32>
    %cst_43 = arith.constant 2.500000e-01 : f32
    %89 = vector.broadcast %cst_43 : f32 to vector<2x1xf32>
    %90 = arith.mulf %88, %89 : vector<2x1xf32>
    %91 = vector.broadcast %90 : vector<2x1xf32> to vector<2x4xf32>
    %92 = arith.subf %86, %91 : vector<2x4xf32>
    %c0_44 = arith.constant 0 : index
    %c0_45 = arith.constant 0 : index
    %93 = vector.load %arg8[%c0_44, %c0_45] : memref<2x4xf32, #tpu.memory_space<vmem>>, vector<2x4xf32>
    tpu.vector_store %arg8[%c0_44, %c0_45], %92 {strides = array<i32>} : memref<2x4xf32, #tpu.memory_space<vmem>>, vector<2x4xf32>,
    return
  }
}

</mosaic_0001>

<llo_original>
// kernel: tpu_custom_call.1
$region0: #{tpu_custom_call.1}
  #allocation0 [shape = 'u32[]', space=smem, size = 0x4, offset = 0x4, fixed_abs, tag = 'smem constant byte address 0x4 - core index']
  #allocation1 [shape = 'u32[144,128]{1,0:T(1,128)}', space=vmem, size = 0x12000, scoped, tag = 'internal scratch']
  #allocation2 [shape = 'f32[1,1]{1,0:T(1,128)S(6)}', space=smem, size = 0x200, scoped, tag = 'scoped memory for tpu_custom_call.1']
  %s0 = inlined_call_operand.<no memory space> [shape: f32[1,1], index: 0, kind: input, shape index: {}]
  %s1 = inlined_call_operand.hbm [shape: f32[16,16], index: 1, kind: input, shape index: {}]
  %s2 = inlined_call_operand.hbm [shape: f32[16,16], index: 2, kind: input, shape index: {}]
  %s3 = inlined_call_operand.hbm [shape: f32[16,16], index: 3, kind: input, shape index: {}]
  %s4 = inlined_call_operand.vmem [shape: f32[2,16], index: 4, kind: input, shape index: {}]
  %s5 = inlined_call_operand.vmem [shape: f32[2,64], index: 5, kind: input, shape index: {}]
  %s6 = inlined_call_operand.hbm [shape: bf16[656,256], index: 6, kind: input, shape index: {}]
  %s7 = inlined_call_operand.vmem [shape: f32[1,768], index: 7, kind: input, shape index: {}]
  %s8 = inlined_call_operand.hbm [shape: f32[2,4], index: 8, kind: output, shape index: {}]
  %s9 = sld [smem:[#allocation0]]
  $region58: #{tpu_custom_call.1} parent=0
    _
  %s11 = ssub.s32 1, %s9
  %s12 = scalar_select 0, %s11, %s9
  %13 = sst [smem:[#allocation2]] %s0
  $region1: #{tpu_custom_call.1} parent=0
    #allocation3 [shape = 'u8[8192]{0}', space=vmem, size = 0x2000, scoped, tag = 'input window, operand 1, single buffered']
    #allocation4 [shape = 's32[1]{0}', space=sflag, size = 0x4, scoped, tag = 'scoped memory for tpu_custom_call.1']
    #allocation5 [shape = 's32[1]{0}', space=sflag, size = 0x4, scoped, tag = 'scoped memory for tpu_custom_call.1']
    #allocation6 [shape = 'u8[8192]{0}', space=vmem, size = 0x2000, scoped, tag = 'input window, operand 2, single buffered']
    #allocation7 [shape = 's32[1]{0}', space=sflag, size = 0x4, scoped, tag = 'scoped memory for tpu_custom_call.1']
    #allocation8 [shape = 'u8[8192]{0}', space=vmem, size = 0x2000, scoped, tag = 'input window, operand 3, single buffered']
    #allocation9 [shape = 'u8[335872]{0}', space=vmem, size = 0x52000, scoped, tag = 'input window, operand 6, single buffered']
    #allocation10 [shape = 's32[1]{0}', space=sflag, size = 0x4, scoped, tag = 'scoped memory for tpu_custom_call.1']
    #allocation11 [shape = 'u8[1024]{0}', space=vmem, size = 0x400, scoped, tag = 'output window, operand 0, single buffered']
    %14 = vsyncpa [#allocation4], 0
    %15 = vsyncpa [#allocation7], 0
    %16 = vsyncpa [#allocation10], 0
    %17 = vsyncpa [#allocation5], 0
    // Predicated region
    $region2: #{tpu_custom_call.1} parent=1 // pred_check
      _
    $region3: #{tpu_custom_call.1} parent=1 // pred_check_branch
      %19 = sbr.rel (0) target = $region5
    $region4: #{tpu_custom_call.1} parent=1 // pred_region
      _
    $region5: #{tpu_custom_call.1} parent=1 // pred_fallthru
      _
    // Predicated region
    $region6: #{tpu_custom_call.1} parent=1 // pred_check
      _
    $region7: #{tpu_custom_call.1} parent=1 // pred_check_branch
      %21 = sbr.rel (0) target = $region9
    $region8: #{tpu_custom_call.1} parent=1 // pred_region
      %s23 = ssub.s32 256, 256
      %24 = vsyncadd [#allocation4], %s23
      %s25 = sshll.u32 [#allocation3], 4
      %s26 = int_to_ptr.vmem [resolvable:$true] %s25
      %31 = dma.hbm_to_vmem [thread:$0]  %s1, 256, %s26, [#allocation4], 128, 128, 8
    $region9: #{tpu_custom_call.1} parent=1 // pred_fallthru
      _
    // Predicated region
    $region10: #{tpu_custom_call.1} parent=1 // pred_check
      _
    $region11: #{tpu_custom_call.1} parent=1 // pred_check_branch
      %33 = sbr.rel (0) target = $region13
    $region12: #{tpu_custom_call.1} parent=1 // pred_region
      %s35 = ssub.s32 256, 256
      %36 = vsyncadd [#allocation7], %s35
      %s37 = sshll.u32 [#allocation6], 4
      %s38 = int_to_ptr.vmem [resolvable:$true] %s37
      %43 = dma.hbm_to_vmem [thread:$0]  %s2, 256, %s38, [#allocation7], 128, 128, 8
    $region13: #{tpu_custom_call.1} parent=1 // pred_fallthru
      _
    // Predicated region
    $region14: #{tpu_custom_call.1} parent=1 // pred_check
      _
    $region15: #{tpu_custom_call.1} parent=1 // pred_check_branch
      %45 = sbr.rel (0) target = $region17
    $region16: #{tpu_custom_call.1} parent=1 // pred_region
      %s47 = ssub.s32 256, 256
      %48 = vsyncadd [#allocation7], %s47
      %s49 = sshll.u32 [#allocation8], 4
      %s50 = int_to_ptr.vmem [resolvable:$true] %s49
      %55 = dma.hbm_to_vmem [thread:$0]  %s3, 256, %s50, [#allocation7], 128, 128, 8
    $region17: #{tpu_custom_call.1} parent=1 // pred_fallthru
      _
    // Predicated region
    $region18: #{tpu_custom_call.1} parent=1 // pred_check
      _
    $region19: #{tpu_custom_call.1} parent=1 // pred_check_branch
      %57 = sbr.rel (0) target = $region21
    $region20: #{tpu_custom_call.1} parent=1 // pred_region
      _
    $region21: #{tpu_custom_call.1} parent=1 // pred_fallthru
      _
    // Predicated region
    $region22: #{tpu_custom_call.1} parent=1 // pred_check
      _
    $region23: #{tpu_custom_call.1} parent=1 // pred_check_branch
      %59 = sbr.rel (0) target = $region25
    $region24: #{tpu_custom_call.1} parent=1 // pred_region
      _
    $region25: #{tpu_custom_call.1} parent=1 // pred_fallthru
      _
    // Predicated region
    $region26: #{tpu_custom_call.1} parent=1 // pred_check
      _
    $region27: #{tpu_custom_call.1} parent=1 // pred_check_branch
      %61 = sbr.rel (0) target = $region29
    $region28: #{tpu_custom_call.1} parent=1 // pred_region
      %s63 = ssub.s32 10496, 10496
      %64 = vsyncadd [#allocation10], %s63
      %s65 = sshll.u32 [#allocation9], 4
      %s66 = int_to_ptr.vmem [resolvable:$true] %s65
      %71 = dma.hbm_to_vmem [thread:$0]  %s6, 10496, %s66, [#allocation10], 128, 128, 8
    $region29: #{tpu_custom_call.1} parent=1 // pred_fallthru
      _
    // Predicated region
    $region30: #{tpu_custom_call.1} parent=1 // pred_check
      _
    $region31: #{tpu_custom_call.1} parent=1 // pred_check_branch
      %73 = sbr.rel (0) target = $region33
    $region32: #{tpu_custom_call.1} parent=1 // pred_region
      _
    $region33: #{tpu_custom_call.1} parent=1 // pred_fallthru
      _
    // Predicated region
    $region34: #{tpu_custom_call.1} parent=1 // pred_check
      _
    $region35: #{tpu_custom_call.1} parent=1 // pred_check_branch
      %75 = sbr.rel (0) target = $region37
    $region36: #{tpu_custom_call.1} parent=1 // pred_region
      %76 = dma.done [#allocation4], 256
    $region37: #{tpu_custom_call.1} parent=1 // pred_fallthru
      _
    // Predicated region
    $region38: #{tpu_custom_call.1} parent=1 // pred_check
      _
    $region39: #{tpu_custom_call.1} parent=1 // pred_check_branch
      %78 = sbr.rel (0) target = $region41
    $region40: #{tpu_custom_call.1} parent=1 // pred_region
      %79 = dma.done [#allocation7], 256
    $region41: #{tpu_custom_call.1} parent=1 // pred_fallthru
      _
    // Predicated region
    $region42: #{tpu_custom_call.1} parent=1 // pred_check
      _
    $region43: #{tpu_custom_call.1} parent=1 // pred_check_branch
      %81 = sbr.rel (0) target = $region45
    $region44: #{tpu_custom_call.1} parent=1 // pred_region
      %82 = dma.done [#allocation7], 256
    $region45: #{tpu_custom_call.1} parent=1 // pred_fallthru
      _
    // Predicated region
    $region46: #{tpu_custom_call.1} parent=1 // pred_check
      _
    $region47: #{tpu_custom_call.1} parent=1 // pred_check_branch
      %84 = sbr.rel (0) target = $region49
    $region48: #{tpu_custom_call.1} parent=1 // pred_region
      %85 = dma.done [#allocation10], 10496
    $region49: #{tpu_custom_call.1} parent=1 // pred_fallthru
      _
    %v87 = vld [vmem:[#allocation3] sm:$0xff]
    %v88 = vld [vmem:[#allocation3 + $0x8] sm:$0xff]
    %v89 = vpack.c.bf16 %v88, %v87
    %v90 = vld [vmem:[#allocation9] sm:$0xf]
    %v91 = vld [vmem:[#allocation9 + $0x8] sm:$0xf]
    %v94 = vunpack.c.l.b16 %v90
    %v95 = vunpack.c.l.b16 %v91
    %v96 = vpack.c.b16 %v95, %v94
    %vm98 = vcmask 130048
    %v100 = vsel %vm98, %v89, 0
    %102 = vmatprep.subr.bf16.mxu0 0
    %103 = vmatpush1.bf16.msra.mxu0 %v96
    %104 = vmatprep.subr.bf16.mxu0 0
    %105 = vmatpush1.bf16.msra.mxu0 0
    %106 = vmatprep.subr.bf16.mxu0 0
    %107 = vmatpush1.bf16.msra.mxu0 0
    %108 = vmatprep.subr.bf16.mxu0 0
    %109 = vmatpush1.bf16.msra.mxu0 0
    %110 = vmatprep.subr.bf16.mxu0 0
    %111 = vmatpush1.bf16.msra.mxu0 0
    %112 = vmatprep.subr.bf16.mxu0 0
    %113 = vmatpush1.bf16.msra.mxu0 0
    %114 = vmatprep.subr.bf16.mxu0 0
    %115 = vmatpush1.bf16.msra.mxu0 0
    %116 = vmatprep.subr.bf16.mxu0 0
    %117 = vmatpush1.bf16.msra.mxu0 0
    %118 = vmatprep.subr.bf16.mxu0 0
    %119 = vmatpush1.bf16.msra.mxu0 0
    %120 = vmatprep.subr.bf16.mxu0 0
    %121 = vmatpush1.bf16.msra.mxu0 0
    %122 = vmatprep.subr.bf16.mxu0 0
    %123 = vmatpush1.bf16.msra.mxu0 0
    %124 = vmatprep.subr.bf16.mxu0 0
    %125 = vmatpush1.bf16.msra.mxu0 0
    %126 = vmatprep.subr.bf16.mxu0 0
    %127 = vmatpush1.bf16.msra.mxu0 0
    %128 = vmatprep.subr.bf16.mxu0 0
    %129 = vmatpush1.bf16.msra.mxu0 0
    %130 = vmatprep.subr.bf16.mxu0 0
    %131 = vmatpush1.bf16.msra.mxu0 0
    %132 = vmatprep.subr.bf16.mxu0 0
    %133 = vmatpush1.bf16.msra.mxu0 0
    %134 = vmatprep.mubr.bf16.mxu0 0
    %135 = vmatmul.mubr.bf16.gmra.mrb[0].mxu0 %v100
    %v136 = vpop.f32.mrb[0].mxu0
    %v137 = vadd.f32 0.0, %v136
    %v138 = vpop.f32.mrb[0].mxu0
    %v139 = vpop.f32.mrb[0].mxu0
    %v140 = vadd.f32 0.0, %v139
    %v141 = vpop.f32.mrb[0].mxu0
    %142 = vdwg.mxu0
    %v143 = vpack.c.bf16 %v140, %v137
    %v144 = vld [vmem:[#allocation9 + $0x10] sm:$0xf]
    %v145 = vld [vmem:[#allocation9 + $0x18] sm:$0xf]
    %v146 = vld [vmem:[#allocation9 + $0x20] sm:$0xf]
    %v147 = vld [vmem:[#allocation9 + $0x28] sm:$0xf]
    %v148 = vld [vmem:[#allocation9 + $0x30] sm:$0xf]
    %v149 = vld [vmem:[#allocation9 + $0x38] sm:$0xf]
    %v150 = vld [vmem:[#allocation9 + $0x40] sm:$0xf]
    %v151 = vld [vmem:[#allocation9 + $0x48] sm:$0xf]
    %v160 = vunpack.c.l.b16 %v144
    %v161 = vunpack.c.l.b16 %v145
    %v162 = vunpack.c.l.b16 %v146
    %v163 = vunpack.c.l.b16 %v147
    %v164 = vunpack.c.l.b16 %v148
    %v165 = vunpack.c.l.b16 %v149
    %v166 = vunpack.c.l.b16 %v150
    %v167 = vunpack.c.l.b16 %v151
    %v168 = vpack.c.b16 %v161, %v160
    %v169 = vpack.c.b16 %v163, %v162
    %v170 = vpack.c.b16 %v165, %v164
    %v171 = vpack.c.b16 %v167, %v166
    %vm176 = vcmask 523264
    %v178 = vsel %vm176, %v143, 0
    %180 = vmatprep.subr.bf16.mxu0 0
    %181 = vmatpush1.bf16.msra.mxu0 %v168
    %182 = vmatprep.subr.bf16.mxu0 0
    %183 = vmatpush1.bf16.msra.mxu0 %v169
    %184 = vmatprep.subr.bf16.mxu0 0
    %185 = vmatpush1.bf16.msra.mxu0 %v170
    %186 = vmatprep.subr.bf16.mxu0 0
    %187 = vmatpush1.bf16.msra.mxu0 %v171
    %188 = vmatprep.subr.bf16.mxu0 0
    %189 = vmatpush1.bf16.msra.mxu0 0
    %190 = vmatprep.subr.bf16.mxu0 0
    %191 = vmatpush1.bf16.msra.mxu0 0
    %192 = vmatprep.subr.bf16.mxu0 0
    %193 = vmatpush1.bf16.msra.mxu0 0
    %194 = vmatprep.subr.bf16.mxu0 0
    %195 = vmatpush1.bf16.msra.mxu0 0
    %196 = vmatprep.subr.bf16.mxu0 0
    %197 = vmatpush1.bf16.msra.mxu0 0
    %198 = vmatprep.subr.bf16.mxu0 0
    %199 = vmatpush1.bf16.msra.mxu0 0
    %200 = vmatprep.subr.bf16.mxu0 0
    %201 = vmatpush1.bf16.msra.mxu0 0
    %202 = vmatprep.subr.bf16.mxu0 0
    %203 = vmatpush1.bf16.msra.mxu0 0
    %204 = vmatprep.subr.bf16.mxu0 0
    %205 = vmatpush1.bf16.msra.mxu0 0
    %206 = vmatprep.subr.bf16.mxu0 0
    %207 = vmatpush1.bf16.msra.mxu0 0
    %208 = vmatprep.subr.bf16.mxu0 0
    %209 = vmatpush1.bf16.msra.mxu0 0
    %210 = vmatprep.subr.bf16.mxu0 0
    %211 = vmatpush1.bf16.msra.mxu0 0
    %212 = vmatprep.mubr.bf16.mxu0 0
    %213 = vmatmul.mubr.bf16.gmra.mrb[0].mxu0 %v178
    %v214 = vpop.f32.mrb[0].mxu0
    %v215 = vadd.f32 0.0, %v214
    %v216 = vpop.f32.mrb[0].mxu0
    %v217 = vpop.f32.mrb[0].mxu0
    %v218 = vadd.f32 0.0, %v217
    %v219 = vpop.f32.mrb[0].mxu0
    %220 = vdwg.mxu0
    %s221 = sld [smem:[#allocation2]]
    %223 = vset.pattern.permute.xlu0 0
    %224 = vperm.xlu0 %223, %v215
    %v225 = vpop.permute.xlu0 %224
    %228 = vset.pattern.permute.xlu0 0
    %229 = vperm.xlu0 %228, %v218
    %v230 = vpop.permute.xlu0 %229
    %232 = vset.pattern.permute.xlu0 1
    %233 = vperm.xlu0 %232, %v215
    %v234 = vpop.permute.xlu0 %233
    %235 = vset.pattern.permute.xlu0 1
    %236 = vperm.xlu0 %235, %v218
    %v237 = vpop.permute.xlu0 %236
    %v238 = vlaneseq
    %v239 = vand.u32 %v238, 127
    %v240 = vlaneseq
    %v241 = vshrl.u32 %v240, 7
    %v242 = vsub.s32 %v239, %v241
    %v243 = vrot.slane %v234, %v242
    %v244 = vadd.s32 %v239, 4294967288
    %v245 = vlaneseq
    %v246 = vshrl.u32 %v245, 7
    %v247 = vsub.s32 %v244, %v246
    %v248 = vrot.slane %v237, %v247
    %vm249 = vcmask 130112
    %v250 = vsel %vm249, %v248, %v243
    %vm251 = vcmask 1042434
    %v252 = vsel %vm251, %v250, %v250
    %vm253 = vcmask 1043459
    %v254 = vsel %vm253, %v250, %v252
    %vm255 = vcmask 1044484
    %v256 = vsel %vm255, %v250, %v254
    %vm257 = vcmask 1045509
    %v258 = vsel %vm257, %v250, %v256
    %vm259 = vcmask 1046534
    %v260 = vsel %vm259, %v250, %v258
    %vm261 = vcmask 1047559
    %v262 = vsel %vm261, %v250, %v260
    %v264 = vadd.f32 %v225, %v262
    %v265 = vadd.f32 %v230, %v262
    %v266 = vld [vmem:[#allocation8] sm:$0xff]
    %v267 = vld [vmem:[#allocation8 + $0x8] sm:$0xff]
    %v268 = vstv %s221
    %v269 = vmul.f32 %v268, %v266
    %v270 = vmul.f32 %v268, %v267
    %v271 = vadd.f32 %v264, %v269
    %v272 = vadd.f32 %v265, %v270
    %vm273 = vcmp.gt.f32.partialorder %v271, 0.0
    %vm274 = vcmp.gt.f32.partialorder %v272, 0.0
    %v275 = vmul.f32 %v271, 0.2
    %v276 = vmul.f32 %v272, 0.2
    %v277 = vsel %vm273, %v271, %v275
    %v278 = vsel %vm274, %v272, %v276
    %v279 = vld [vmem:[#allocation6] sm:$0xff]
    %v280 = vld [vmem:[#allocation6 + $0x8] sm:$0xff]
    %vm281 = vcmp.gt.f32.partialorder %v279, 0.0
    %vm282 = vcmp.gt.f32.partialorder %v280, 0.0
    %v283 = vsel %vm281, %v277, -1e+30
    %v284 = vsel %vm282, %v278, -1e+30
    %v285 = vsel %vm98, %v283, -inf
    %286 = vmax.xlane.f32.xlu0 %v285
    %v287 = vpop.xlane.xlu0 %286
    %v288 = vsel %vm98, %v284, -inf
    %289 = vmax.xlane.f32.xlu0 %v288
    %v290 = vpop.xlane.xlu0 %289
    %v291 = vsub.f32 %v283, %v287
    %v292 = vsub.f32 %v284, %v290
    %v293 = vmul.f32 %v291, 1.442695
    %v294 = vpow.pop %v293
    %v295 = vmul.f32 %v292, 1.442695
    %v296 = vpow.pop %v295
    %v297 = vsel %vm98, %v294, 0.0
    %298 = vadd.xlane.f32.xlu0 %v297
    %v299 = vpop.xlane.xlu0 %298
    %v300 = vsel %vm98, %v296, 0.0
    %301 = vadd.xlane.f32.xlu0 %v300
    %v302 = vpop.xlane.xlu0 %301
    %v303 = vrcp.pop %v299
    %v304 = vrcp.pop %v302
    %v305 = vmul.f32 %v294, %v303
    %v306 = vmul.f32 %v296, %v304
    %v307 = vld [vmem:[%s7] sm:$0x1]
    %v308 = vpack.c.bf16 %v306, %v305
    %v310 = vlaneseq
    %v311 = vshrl.u32 %v310, 7
    %v312 = vsub.s32 0, %v311
    %v313 = vrot.slane %v307, %v312
    %v316 = vsel %vm98, %v308, 0
    %318 = vmatprep.subr.bf16.mxu0 0
    %319 = vmatpush1.bf16.msra.mxu0 %v143
    %320 = vmatprep.subr.bf16.mxu0 0
    %321 = vmatpush1.bf16.msra.mxu0 0
    %322 = vmatprep.subr.bf16.mxu0 0
    %323 = vmatpush1.bf16.msra.mxu0 0
    %324 = vmatprep.subr.bf16.mxu0 0
    %325 = vmatpush1.bf16.msra.mxu0 0
    %326 = vmatprep.subr.bf16.mxu0 0
    %327 = vmatpush1.bf16.msra.mxu0 0
    %328 = vmatprep.subr.bf16.mxu0 0
    %329 = vmatpush1.bf16.msra.mxu0 0
    %330 = vmatprep.subr.bf16.mxu0 0
    %331 = vmatpush1.bf16.msra.mxu0 0
    %332 = vmatprep.subr.bf16.mxu0 0
    %333 = vmatpush1.bf16.msra.mxu0 0
    %334 = vmatprep.subr.bf16.mxu0 0
    %335 = vmatpush1.bf16.msra.mxu0 0
    %336 = vmatprep.subr.bf16.mxu0 0
    %337 = vmatpush1.bf16.msra.mxu0 0
    %338 = vmatprep.subr.bf16.mxu0 0
    %339 = vmatpush1.bf16.msra.mxu0 0
    %340 = vmatprep.subr.bf16.mxu0 0
    %341 = vmatpush1.bf16.msra.mxu0 0
    %342 = vmatprep.subr.bf16.mxu0 0
    %343 = vmatpush1.bf16.msra.mxu0 0
    %344 = vmatprep.subr.bf16.mxu0 0
    %345 = vmatpush1.bf16.msra.mxu0 0
    %346 = vmatprep.subr.bf16.mxu0 0
    %347 = vmatpush1.bf16.msra.mxu0 0
    %348 = vmatprep.subr.bf16.mxu0 0
    %349 = vmatpush1.bf16.msra.mxu0 0
    %350 = vmatprep.mubr.bf16.mxu0 0
    %351 = vmatmul.mubr.bf16.gmra.mrb[0].mxu0 %v316
    %v352 = vpop.f32.mrb[0].mxu0
    %v353 = vadd.f32 %v313, %v352
    %v354 = vpop.f32.mrb[0].mxu0
    %v355 = vpop.f32.mrb[0].mxu0
    %v356 = vadd.f32 %v313, %v355
    %v357 = vpop.f32.mrb[0].mxu0
    %358 = vdwg.mxu0
    %v359 = vld [vmem:[#allocation9 + $0x50] sm:$0xf]
    %v360 = vld [vmem:[#allocation9 + $0x58] sm:$0xf]
    %v361 = vld [vmem:[#allocation9 + $0x60] sm:$0xf]
    %v362 = vld [vmem:[#allocation9 + $0x68] sm:$0xf]
    %v363 = vld [vmem:[#allocation9 + $0x70] sm:$0xf]
    %v364 = vld [vmem:[#allocation9 + $0x78] sm:$0xf]
    %v365 = vld [vmem:[#allocation9 + $0x80] sm:$0xf]
    %v366 = vld [vmem:[#allocation9 + $0x88] sm:$0xf]
    %v367 = vld [vmem:[%s7 + $0x1] sm:$0x1]
    %v368 = vpack.c.bf16 %v356, %v353
    %v370 = vlaneseq
    %v371 = vshrl.u32 %v370, 7
    %v372 = vsub.s32 0, %v371
    %v373 = vrot.slane %v367, %v372
    %v383 = vunpack.c.l.b16 %v359
    %v384 = vunpack.c.l.b16 %v360
    %v385 = vunpack.c.l.b16 %v361
    %v386 = vunpack.c.l.b16 %v362
    %v387 = vunpack.c.l.b16 %v363
    %v388 = vunpack.c.l.b16 %v364
    %v389 = vunpack.c.l.b16 %v365
    %v390 = vunpack.c.l.b16 %v366
    %v391 = vpack.c.b16 %v384, %v383
    %v392 = vpack.c.b16 %v386, %v385
    %v393 = vpack.c.b16 %v388, %v387
    %v394 = vpack.c.b16 %v390, %v389
    %v400 = vsel %vm176, %v368, 0
    %402 = vmatprep.subr.bf16.mxu0 0
    %403 = vmatpush1.bf16.msra.mxu0 %v391
    %404 = vmatprep.subr.bf16.mxu0 0
    %405 = vmatpush1.bf16.msra.mxu0 %v392
    %406 = vmatprep.subr.bf16.mxu0 0
    %407 = vmatpush1.bf16.msra.mxu0 %v393
    %408 = vmatprep.subr.bf16.mxu0 0
    %409 = vmatpush1.bf16.msra.mxu0 %v394
    %410 = vmatprep.subr.bf16.mxu0 0
    %411 = vmatpush1.bf16.msra.mxu0 0
    %412 = vmatprep.subr.bf16.mxu0 0
    %413 = vmatpush1.bf16.msra.mxu0 0
    %414 = vmatprep.subr.bf16.mxu0 0
    %415 = vmatpush1.bf16.msra.mxu0 0
    %416 = vmatprep.subr.bf16.mxu0 0
    %417 = vmatpush1.bf16.msra.mxu0 0
    %418 = vmatprep.subr.bf16.mxu0 0
    %419 = vmatpush1.bf16.msra.mxu0 0
    %420 = vmatprep.subr.bf16.mxu0 0
    %421 = vmatpush1.bf16.msra.mxu0 0
    %422 = vmatprep.subr.bf16.mxu0 0
    %423 = vmatpush1.bf16.msra.mxu0 0
    %424 = vmatprep.subr.bf16.mxu0 0
    %425 = vmatpush1.bf16.msra.mxu0 0
    %426 = vmatprep.subr.bf16.mxu0 0
    %427 = vmatpush1.bf16.msra.mxu0 0
    %428 = vmatprep.subr.bf16.mxu0 0
    %429 = vmatpush1.bf16.msra.mxu0 0
    %430 = vmatprep.subr.bf16.mxu0 0
    %431 = vmatpush1.bf16.msra.mxu0 0
    %432 = vmatprep.subr.bf16.mxu0 0
    %433 = vmatpush1.bf16.msra.mxu0 0
    %434 = vmatprep.mubr.bf16.mxu0 0
    %435 = vmatmul.mubr.bf16.gmra.mrb[0].mxu0 %v400
    %v436 = vpop.f32.mrb[0].mxu0
    %v437 = vadd.f32 %v373, %v436
    %v438 = vpop.f32.mrb[0].mxu0
    %v439 = vpop.f32.mrb[0].mxu0
    %v440 = vadd.f32 %v373, %v439
    %v441 = vpop.f32.mrb[0].mxu0
    %442 = vdwg.mxu0
    %v443 = vmax.f32 %v437, 0.0
    %v444 = vmax.f32 %v440, 0.0
    %v445 = vld [vmem:[%s4] sm:$0x3]
    %v446 = vpack.c.bf16 %v445, %v445
    %v447 = vpack.c.bf16 %v444, %v443
    %v449 = vsel %vm98, %v446, 0
    %451 = vmatprep.subr.bf16.mxu0 0
    %452 = vmatpush1.bf16.msra.mxu0 %v447
    %453 = vmatprep.subr.bf16.mxu0 0
    %454 = vmatpush1.bf16.msra.mxu0 0
    %455 = vmatprep.subr.bf16.mxu0 0
    %456 = vmatpush1.bf16.msra.mxu0 0
    %457 = vmatprep.subr.bf16.mxu0 0
    %458 = vmatpush1.bf16.msra.mxu0 0
    %459 = vmatprep.subr.bf16.mxu0 0
    %460 = vmatpush1.bf16.msra.mxu0 0
    %461 = vmatprep.subr.bf16.mxu0 0
    %462 = vmatpush1.bf16.msra.mxu0 0
    %463 = vmatprep.subr.bf16.mxu0 0
    %464 = vmatpush1.bf16.msra.mxu0 0
    %465 = vmatprep.subr.bf16.mxu0 0
    %466 = vmatpush1.bf16.msra.mxu0 0
    %467 = vmatprep.subr.bf16.mxu0 0
    %468 = vmatpush1.bf16.msra.mxu0 0
    %469 = vmatprep.subr.bf16.mxu0 0
    %470 = vmatpush1.bf16.msra.mxu0 0
    %471 = vmatprep.subr.bf16.mxu0 0
    %472 = vmatpush1.bf16.msra.mxu0 0
    %473 = vmatprep.subr.bf16.mxu0 0
    %474 = vmatpush1.bf16.msra.mxu0 0
    %475 = vmatprep.subr.bf16.mxu0 0
    %476 = vmatpush1.bf16.msra.mxu0 0
    %477 = vmatprep.subr.bf16.mxu0 0
    %478 = vmatpush1.bf16.msra.mxu0 0
    %479 = vmatprep.subr.bf16.mxu0 0
    %480 = vmatpush1.bf16.msra.mxu0 0
    %481 = vmatprep.subr.bf16.mxu0 0
    %482 = vmatpush1.bf16.msra.mxu0 0
    %483 = vmatprep.mubr.bf16.mxu0 0
    %484 = vmatmul.mubr.bf16.gmra.mrb[0].mxu0 %v449
    %v485 = vpop.f32.mrb[0].mxu0
    %v486 = vadd.f32 0.0, %v485
    %v487 = vpop.f32.mrb[0].mxu0
    %v488 = vpop.f32.mrb[0].mxu0
    %v489 = vpop.f32.mrb[0].mxu0
    %490 = vdwg.mxu0
    %v491 = vld [vmem:[#allocation9 + $0x90] sm:$0xf]
    %v492 = vld [vmem:[#allocation9 + $0x98] sm:$0xf]
    %v493 = vld [vmem:[#allocation9 + $0xa0] sm:$0xf]
    %v494 = vld [vmem:[#allocation9 + $0xa8] sm:$0xf]
    %v495 = vld [vmem:[#allocation9 + $0xb0] sm:$0xf]
    %v496 = vld [vmem:[#allocation9 + $0xb8] sm:$0xf]
    %v497 = vld [vmem:[#allocation9 + $0xc0] sm:$0xf]
    %v498 = vld [vmem:[#allocation9 + $0xc8] sm:$0xf]
    %v499 = vld [vmem:[%s7 + $0x2] sm:$0x1]
    %v500 = vld [vmem:[%s5] sm:$0x3]
    %v501 = vpack.c.bf16 %v500, %v500
    %v503 = vlaneseq
    %v504 = vshrl.u32 %v503, 7
    %v505 = vsub.s32 0, %v504
    %v506 = vrot.slane %v499, %v505
    %v516 = vunpack.c.l.b16 %v491
    %v517 = vunpack.c.l.b16 %v492
    %v518 = vunpack.c.l.b16 %v493
    %v519 = vunpack.c.l.b16 %v494
    %v520 = vunpack.c.l.b16 %v495
    %v521 = vunpack.c.l.b16 %v496
    %v522 = vunpack.c.l.b16 %v497
    %v523 = vunpack.c.l.b16 %v498
    %v524 = vpack.c.b16 %v517, %v516
    %v525 = vpack.c.b16 %v519, %v518
    %v526 = vpack.c.b16 %v521, %v520
    %v527 = vpack.c.b16 %v523, %v522
    %v533 = vsel %vm176, %v501, 0
    %535 = vmatprep.subr.bf16.mxu0 0
    %536 = vmatpush1.bf16.msra.mxu0 %v524
    %537 = vmatprep.subr.bf16.mxu0 0
    %538 = vmatpush1.bf16.msra.mxu0 %v525
    %539 = vmatprep.subr.bf16.mxu0 0
    %540 = vmatpush1.bf16.msra.mxu0 %v526
    %541 = vmatprep.subr.bf16.mxu0 0
    %542 = vmatpush1.bf16.msra.mxu0 %v527
    %543 = vmatprep.subr.bf16.mxu0 0
    %544 = vmatpush1.bf16.msra.mxu0 0
    %545 = vmatprep.subr.bf16.mxu0 0
    %546 = vmatpush1.bf16.msra.mxu0 0
    %547 = vmatprep.subr.bf16.mxu0 0
    %548 = vmatpush1.bf16.msra.mxu0 0
    %549 = vmatprep.subr.bf16.mxu0 0
    %550 = vmatpush1.bf16.msra.mxu0 0
    %551 = vmatprep.subr.bf16.mxu0 0
    %552 = vmatpush1.bf16.msra.mxu0 0
    %553 = vmatprep.subr.bf16.mxu0 0
    %554 = vmatpush1.bf16.msra.mxu0 0
    %555 = vmatprep.subr.bf16.mxu0 0
    %556 = vmatpush1.bf16.msra.mxu0 0
    %557 = vmatprep.subr.bf16.mxu0 0
    %558 = vmatpush1.bf16.msra.mxu0 0
    %559 = vmatprep.subr.bf16.mxu0 0
    %560 = vmatpush1.bf16.msra.mxu0 0
    %561 = vmatprep.subr.bf16.mxu0 0
    %562 = vmatpush1.bf16.msra.mxu0 0
    %563 = vmatprep.subr.bf16.mxu0 0
    %564 = vmatpush1.bf16.msra.mxu0 0
    %565 = vmatprep.subr.bf16.mxu0 0
    %566 = vmatpush1.bf16.msra.mxu0 0
    %567 = vmatprep.mubr.bf16.mxu0 0
    %568 = vmatmul.mubr.bf16.gmra.mrb[0].mxu0 %v533
    %v569 = vpop.f32.mrb[0].mxu0
    %v570 = vadd.f32 %v506, %v569
    %v571 = vpop.f32.mrb[0].mxu0
    %v572 = vpop.f32.mrb[0].mxu0
    %v573 = vpop.f32.mrb[0].mxu0
    %574 = vdwg.mxu0
    %v575 = vmax.f32 %v570, 0.0
    %v576 = vld [vmem:[#allocation9 + $0xd0] sm:$0xff]
    %v577 = vld [vmem:[#allocation9 + $0xd8] sm:$0xff]
    %v578 = vld [vmem:[#allocation9 + $0xe0] sm:$0xff]
    %v579 = vld [vmem:[#allocation9 + $0xe8] sm:$0xff]
    %v580 = vld [vmem:[#allocation9 + $0xf0] sm:$0xff]
    %v581 = vld [vmem:[#allocation9 + $0xf8] sm:$0xff]
    %v582 = vld [vmem:[#allocation9 + $0x100] sm:$0xff]
    %v583 = vld [vmem:[#allocation9 + $0x108] sm:$0xff]
    %v584 = vld [vmem:[#allocation9 + $0x110] sm:$0xff]
    %v585 = vld [vmem:[#allocation9 + $0x118] sm:$0xff]
    %v586 = vld [vmem:[#allocation9 + $0x120] sm:$0xff]
    %v587 = vld [vmem:[#allocation9 + $0x128] sm:$0xff]
    %v588 = vld [vmem:[#allocation9 + $0x130] sm:$0xff]
    %v589 = vld [vmem:[#allocation9 + $0x138] sm:$0xff]
    %v590 = vld [vmem:[#allocation9 + $0x140] sm:$0xff]
    %v591 = vld [vmem:[#allocation9 + $0x148] sm:$0xff]
    %v592 = vld [vmem:[#allocation9 + $0x150] sm:$0xff]
    %v593 = vld [vmem:[#allocation9 + $0x158] sm:$0xff]
    %v594 = vld [vmem:[#allocation9 + $0x160] sm:$0xff]
    %v595 = vld [vmem:[#allocation9 + $0x168] sm:$0xff]
    %v596 = vld [vmem:[#allocation9 + $0x170] sm:$0xff]
    %v597 = vld [vmem:[#allocation9 + $0x178] sm:$0xff]
    %v598 = vld [vmem:[#allocation9 + $0x180] sm:$0xff]
    %v599 = vld [vmem:[#allocation9 + $0x188] sm:$0xff]
    %v600 = vld [vmem:[%s7 + $0x3] sm:$0x3]
    %v601 = vpack.c.bf16 %v486, %v486
    %v602 = vpack.c.bf16 %v575, %v575
    %v611 = vunpack.c.l.b16 %v592
    %v612 = vunpack.c.h.b16 %v592
    %v613 = vunpack.c.l.b16 %v593
    %v614 = vunpack.c.h.b16 %v593
    %v615 = vunpack.c.l.b16 %v594
    %v616 = vunpack.c.h.b16 %v594
    %v617 = vunpack.c.l.b16 %v595
    %v618 = vunpack.c.h.b16 %v595
    %v619 = vunpack.c.l.b16 %v596
    %v620 = vunpack.c.h.b16 %v596
    %v621 = vunpack.c.l.b16 %v597
    %v622 = vunpack.c.h.b16 %v597
    %v623 = vunpack.c.l.b16 %v598
    %v624 = vunpack.c.h.b16 %v598
    %v625 = vunpack.c.l.b16 %v599
    %v626 = vunpack.c.h.b16 %v599
    %v627 = vpack.c.b16 %v613, %v611
    %v628 = vpack.c.b16 %v614, %v612
    %v629 = vpack.c.b16 %v617, %v615
    %v630 = vpack.c.b16 %v618, %v616
    %v631 = vpack.c.b16 %v621, %v619
    %v632 = vpack.c.b16 %v622, %v620
    %v633 = vpack.c.b16 %v625, %v623
    %v634 = vpack.c.b16 %v626, %v624
    %v644 = vsel %vm176, %v602, 0
    %646 = vmatprep.subr.bf16.mxu0 %v628
    %647 = vmatpush1.bf16.msra.mxu0 %v627
    %648 = vmatprep.subr.bf16.mxu0 %v630
    %649 = vmatpush1.bf16.msra.mxu0 %v629
    %650 = vmatprep.subr.bf16.mxu0 %v632
    %651 = vmatpush1.bf16.msra.mxu0 %v631
    %652 = vmatprep.subr.bf16.mxu0 %v634
    %653 = vmatpush1.bf16.msra.mxu0 %v633
    %654 = vmatprep.subr.bf16.mxu0 0
    %655 = vmatpush1.bf16.msra.mxu0 0
    %656 = vmatprep.subr.bf16.mxu0 0
    %657 = vmatpush1.bf16.msra.mxu0 0
    %658 = vmatprep.subr.bf16.mxu0 0
    %659 = vmatpush1.bf16.msra.mxu0 0
    %660 = vmatprep.subr.bf16.mxu0 0
    %661 = vmatpush1.bf16.msra.mxu0 0
    %662 = vmatprep.subr.bf16.mxu0 0
    %663 = vmatpush1.bf16.msra.mxu0 0
    %664 = vmatprep.subr.bf16.mxu0 0
    %665 = vmatpush1.bf16.msra.mxu0 0
    %666 = vmatprep.subr.bf16.mxu0 0
    %667 = vmatpush1.bf16.msra.mxu0 0
    %668 = vmatprep.subr.bf16.mxu0 0
    %669 = vmatpush1.bf16.msra.mxu0 0
    %670 = vmatprep.subr.bf16.mxu0 0
    %671 = vmatpush1.bf16.msra.mxu0 0
    %672 = vmatprep.subr.bf16.mxu0 0
    %673 = vmatpush1.bf16.msra.mxu0 0
    %674 = vmatprep.subr.bf16.mxu0 0
    %675 = vmatpush1.bf16.msra.mxu0 0
    %676 = vmatprep.subr.bf16.mxu0 0
    %677 = vmatpush1.bf16.msra.mxu0 0
    %678 = vmatprep.mubr.bf16.mxu0 0
    %679 = vmatmul.mubr.bf16.gmra.mrb[0].mxu0 %v644
    %v680 = vpop.f32.mrb[0].mxu0
    %v681 = vadd.f32 0.0, %v680
    %v682 = vpop.f32.mrb[0].mxu0
    %v683 = vadd.f32 0.0, %v682
    %v684 = vpop.f32.mrb[0].mxu0
    %v685 = vpop.f32.mrb[0].mxu0
    %686 = vdwg.mxu0
    %v703 = vunpack.c.l.b16 %v576
    %v704 = vunpack.c.h.b16 %v576
    %v705 = vunpack.c.l.b16 %v577
    %v706 = vunpack.c.h.b16 %v577
    %v707 = vunpack.c.l.b16 %v578
    %v708 = vunpack.c.h.b16 %v578
    %v709 = vunpack.c.l.b16 %v579
    %v710 = vunpack.c.h.b16 %v579
    %v711 = vunpack.c.l.b16 %v580
    %v712 = vunpack.c.h.b16 %v580
    %v713 = vunpack.c.l.b16 %v581
    %v714 = vunpack.c.h.b16 %v581
    %v715 = vunpack.c.l.b16 %v582
    %v716 = vunpack.c.h.b16 %v582
    %v717 = vunpack.c.l.b16 %v583
    %v718 = vunpack.c.h.b16 %v583
    %v719 = vunpack.c.l.b16 %v584
    %v720 = vunpack.c.h.b16 %v584
    %v721 = vunpack.c.l.b16 %v585
    %v722 = vunpack.c.h.b16 %v585
    %v723 = vunpack.c.l.b16 %v586
    %v724 = vunpack.c.h.b16 %v586
    %v725 = vunpack.c.l.b16 %v587
    %v726 = vunpack.c.h.b16 %v587
    %v727 = vunpack.c.l.b16 %v588
    %v728 = vunpack.c.h.b16 %v588
    %v729 = vunpack.c.l.b16 %v589
    %v730 = vunpack.c.h.b16 %v589
    %v731 = vunpack.c.l.b16 %v590
    %v732 = vunpack.c.h.b16 %v590
    %v733 = vunpack.c.l.b16 %v591
    %v734 = vunpack.c.h.b16 %v591
    %v735 = vpack.c.b16 %v705, %v703
    %v736 = vpack.c.b16 %v706, %v704
    %v737 = vpack.c.b16 %v709, %v707
    %v738 = vpack.c.b16 %v710, %v708
    %v739 = vpack.c.b16 %v713, %v711
    %v740 = vpack.c.b16 %v714, %v712
    %v741 = vpack.c.b16 %v717, %v715
    %v742 = vpack.c.b16 %v718, %v716
    %v743 = vpack.c.b16 %v721, %v719
    %v744 = vpack.c.b16 %v722, %v720
    %v745 = vpack.c.b16 %v725, %v723
    %v746 = vpack.c.b16 %v726, %v724
    %v747 = vpack.c.b16 %v729, %v727
    %v748 = vpack.c.b16 %v730, %v728
    %v749 = vpack.c.b16 %v733, %v731
    %v750 = vpack.c.b16 %v734, %v732
    %767 = vmatprep.subr.bf16.mxu0 %v736
    %768 = vmatpush1.bf16.msra.mxu0 %v735
    %769 = vmatprep.subr.bf16.mxu0 %v738
    %770 = vmatpush1.bf16.msra.mxu0 %v737
    %771 = vmatprep.subr.bf16.mxu0 %v740
    %772 = vmatpush1.bf16.msra.mxu0 %v739
    %773 = vmatprep.subr.bf16.mxu0 %v742
    %774 = vmatpush1.bf16.msra.mxu0 %v741
    %775 = vmatprep.subr.bf16.mxu0 %v744
    %776 = vmatpush1.bf16.msra.mxu0 %v743
    %777 = vmatprep.subr.bf16.mxu0 %v746
    %778 = vmatpush1.bf16.msra.mxu0 %v745
    %779 = vmatprep.subr.bf16.mxu0 %v748
    %780 = vmatpush1.bf16.msra.mxu0 %v747
    %781 = vmatprep.subr.bf16.mxu0 %v750
    %782 = vmatpush1.bf16.msra.mxu0 %v749
    %783 = vmatprep.subr.bf16.mxu0 0
    %784 = vmatpush1.bf16.msra.mxu0 0
    %785 = vmatprep.subr.bf16.mxu0 0
    %786 = vmatpush1.bf16.msra.mxu0 0
    %787 = vmatprep.subr.bf16.mxu0 0
    %788 = vmatpush1.bf16.msra.mxu0 0
    %789 = vmatprep.subr.bf16.mxu0 0
    %790 = vmatpush1.bf16.msra.mxu0 0
    %791 = vmatprep.subr.bf16.mxu0 0
    %792 = vmatpush1.bf16.msra.mxu0 0
    %793 = vmatprep.subr.bf16.mxu0 0
    %794 = vmatpush1.bf16.msra.mxu0 0
    %795 = vmatprep.subr.bf16.mxu0 0
    %796 = vmatpush1.bf16.msra.mxu0 0
    %797 = vmatprep.subr.bf16.mxu0 0
    %798 = vmatpush1.bf16.msra.mxu0 0
    %799 = vmatprep.mubr.bf16.mxu0 0
    %800 = vmatmul.mubr.bf16.gmra.mrb[0].mxu0 %v601
    %v801 = vpop.f32.mrb[0].mxu0
    %v802 = vadd.f32 %v681, %v801
    %v803 = vpop.f32.mrb[0].mxu0
    %v804 = vadd.f32 %v683, %v803
    %v805 = vpop.f32.mrb[0].mxu0
    %v806 = vpop.f32.mrb[0].mxu0
    %807 = vdwg.mxu0
    %v809 = vlaneseq
    %v810 = vshrl.u32 %v809, 7
    %v811 = vsub.s32 0, %v810
    %v812 = vrot.slane %v600, %v811
    %v813 = vlaneseq
    %v814 = vshrl.u32 %v813, 7
    %v815 = vsub.s32 1, %v814
    %v816 = vrot.slane %v600, %v815
    %v819 = vadd.f32 %v802, %v812
    %v820 = vadd.f32 %v804, %v816
    %v821 = vmax.f32 %v819, 0.0
    %v822 = vmax.f32 %v820, 0.0
    %v823 = vld [vmem:[#allocation9 + $0x190] sm:$0xf]
    %v824 = vld [vmem:[#allocation9 + $0x198] sm:$0xf]
    %v825 = vld [vmem:[#allocation9 + $0x1a0] sm:$0xf]
    %v826 = vld [vmem:[#allocation9 + $0x1a8] sm:$0xf]
    %v827 = vld [vmem:[#allocation9 + $0x1b0] sm:$0xf]
    %v828 = vld [vmem:[#allocation9 + $0x1b8] sm:$0xf]
    %v829 = vld [vmem:[#allocation9 + $0x1c0] sm:$0xf]
    %v830 = vld [vmem:[#allocation9 + $0x1c8] sm:$0xf]
    %v831 = vld [vmem:[#allocation9 + $0x1d0] sm:$0xf]
    %v832 = vld [vmem:[#allocation9 + $0x1d8] sm:$0xf]
    %v833 = vld [vmem:[#allocation9 + $0x1e0] sm:$0xf]
    %v834 = vld [vmem:[#allocation9 + $0x1e8] sm:$0xf]
    %v835 = vld [vmem:[#allocation9 + $0x1f0] sm:$0xf]
    %v836 = vld [vmem:[#allocation9 + $0x1f8] sm:$0xf]
    %v837 = vld [vmem:[#allocation9 + $0x200] sm:$0xf]
    %v838 = vld [vmem:[#allocation9 + $0x208] sm:$0xf]
    %v839 = vld [vmem:[#allocation9 + $0x210] sm:$0xf]
    %v840 = vld [vmem:[#allocation9 + $0x218] sm:$0xf]
    %v841 = vld [vmem:[#allocation9 + $0x220] sm:$0xf]
    %v842 = vld [vmem:[#allocation9 + $0x228] sm:$0xf]
    %v843 = vld [vmem:[#allocation9 + $0x230] sm:$0xf]
    %v844 = vld [vmem:[#allocation9 + $0x238] sm:$0xf]
    %v845 = vld [vmem:[#allocation9 + $0x240] sm:$0xf]
    %v846 = vld [vmem:[#allocation9 + $0x248] sm:$0xf]
    %v847 = vld [vmem:[#allocation9 + $0x250] sm:$0xf]
    %v848 = vld [vmem:[#allocation9 + $0x258] sm:$0xf]
    %v849 = vld [vmem:[#allocation9 + $0x260] sm:$0xf]
    %v850 = vld [vmem:[#allocation9 + $0x268] sm:$0xf]
    %v851 = vld [vmem:[#allocation9 + $0x270] sm:$0xf]
    %v852 = vld [vmem:[#allocation9 + $0x278] sm:$0xf]
    %v853 = vld [vmem:[#allocation9 + $0x280] sm:$0xf]
    %v854 = vld [vmem:[#allocation9 + $0x288] sm:$0xf]
    %v855 = vld [vmem:[%s7 + $0x5] sm:$0x1]
    %v856 = vpack.c.bf16 %v821, %v821
    %v857 = vpack.c.bf16 %v822, %v822
    %v859 = vlaneseq
    %v860 = vshrl.u32 %v859, 7
    %v861 = vsub.s32 0, %v860
    %v862 = vrot.slane %v855, %v861
    %v896 = vunpack.c.l.b16 %v823
    %v897 = vunpack.c.l.b16 %v824
    %v898 = vunpack.c.l.b16 %v825
    %v899 = vunpack.c.l.b16 %v826
    %v900 = vunpack.c.l.b16 %v827
    %v901 = vunpack.c.l.b16 %v828
    %v902 = vunpack.c.l.b16 %v829
    %v903 = vunpack.c.l.b16 %v830
    %v904 = vunpack.c.l.b16 %v831
    %v905 = vunpack.c.l.b16 %v832
    %v906 = vunpack.c.l.b16 %v833
    %v907 = vunpack.c.l.b16 %v834
    %v908 = vunpack.c.l.b16 %v835
    %v909 = vunpack.c.l.b16 %v836
    %v910 = vunpack.c.l.b16 %v837
    %v911 = vunpack.c.l.b16 %v838
    %v912 = vunpack.c.l.b16 %v839
    %v913 = vunpack.c.l.b16 %v840
    %v914 = vunpack.c.l.b16 %v841
    %v915 = vunpack.c.l.b16 %v842
    %v916 = vunpack.c.l.b16 %v843
    %v917 = vunpack.c.l.b16 %v844
    %v918 = vunpack.c.l.b16 %v845
    %v919 = vunpack.c.l.b16 %v846
    %v920 = vunpack.c.l.b16 %v847
    %v921 = vunpack.c.l.b16 %v848
    %v922 = vunpack.c.l.b16 %v849
    %v923 = vunpack.c.l.b16 %v850
    %v924 = vunpack.c.l.b16 %v851
    %v925 = vunpack.c.l.b16 %v852
    %v926 = vunpack.c.l.b16 %v853
    %v927 = vunpack.c.l.b16 %v854
    %v928 = vpack.c.b16 %v897, %v896
    %v929 = vpack.c.b16 %v899, %v898
    %v930 = vpack.c.b16 %v901, %v900
    %v931 = vpack.c.b16 %v903, %v902
    %v932 = vpack.c.b16 %v905, %v904
    %v933 = vpack.c.b16 %v907, %v906
    %v934 = vpack.c.b16 %v909, %v908
    %v935 = vpack.c.b16 %v911, %v910
    %v936 = vpack.c.b16 %v913, %v912
    %v937 = vpack.c.b16 %v915, %v914
    %v938 = vpack.c.b16 %v917, %v916
    %v939 = vpack.c.b16 %v919, %v918
    %v940 = vpack.c.b16 %v921, %v920
    %v941 = vpack.c.b16 %v923, %v922
    %v942 = vpack.c.b16 %v925, %v924
    %v943 = vpack.c.b16 %v927, %v926
    %960 = vmatprep.subr.bf16.mxu0 0
    %961 = vmatpush1.bf16.msra.mxu0 %v928
    %962 = vmatprep.subr.bf16.mxu0 0
    %963 = vmatpush1.bf16.msra.mxu0 %v929
    %964 = vmatprep.subr.bf16.mxu0 0
    %965 = vmatpush1.bf16.msra.mxu0 %v930
    %966 = vmatprep.subr.bf16.mxu0 0
    %967 = vmatpush1.bf16.msra.mxu0 %v931
    %968 = vmatprep.subr.bf16.mxu0 0
    %969 = vmatpush1.bf16.msra.mxu0 %v932
    %970 = vmatprep.subr.bf16.mxu0 0
    %971 = vmatpush1.bf16.msra.mxu0 %v933
    %972 = vmatprep.subr.bf16.mxu0 0
    %973 = vmatpush1.bf16.msra.mxu0 %v934
    %974 = vmatprep.subr.bf16.mxu0 0
    %975 = vmatpush1.bf16.msra.mxu0 %v935
    %976 = vmatprep.subr.bf16.mxu0 0
    %977 = vmatpush1.bf16.msra.mxu0 %v936
    %978 = vmatprep.subr.bf16.mxu0 0
    %979 = vmatpush1.bf16.msra.mxu0 %v937
    %980 = vmatprep.subr.bf16.mxu0 0
    %981 = vmatpush1.bf16.msra.mxu0 %v938
    %982 = vmatprep.subr.bf16.mxu0 0
    %983 = vmatpush1.bf16.msra.mxu0 %v939
    %984 = vmatprep.subr.bf16.mxu0 0
    %985 = vmatpush1.bf16.msra.mxu0 %v940
    %986 = vmatprep.subr.bf16.mxu0 0
    %987 = vmatpush1.bf16.msra.mxu0 %v941
    %988 = vmatprep.subr.bf16.mxu0 0
    %989 = vmatpush1.bf16.msra.mxu0 %v942
    %990 = vmatprep.subr.bf16.mxu0 0
    %991 = vmatpush1.bf16.msra.mxu0 %v943
    %992 = vmatprep.mubr.bf16.mxu0 %v857
    %993 = vmatmul.mubr.bf16.gmra.mrb[0].mxu0 %v856
    %v994 = vpop.f32.mrb[0].mxu0
    %v995 = vadd.f32 %v862, %v994
    %v996 = vpop.f32.mrb[0].mxu0
    %v997 = vpop.f32.mrb[0].mxu0
    %v998 = vpop.f32.mrb[0].mxu0
    %999 = vdwg.mxu0
    %1001 = vset.pattern.permute.xlu0 0
    %1002 = vperm.xlu0 %1001, %v995
    %v1003 = vpop.permute.xlu0 %1002
    %v1005 = vadd.f32 %v1003, %v995
    %1006 = vrot.lane.b32.xlu0 %v995, 127
    %v1007 = vpop.permute.xlu0 %1006
    %vm1009 = vcmask 25600
    %v1010 = vsel %vm1009, %v1007, 0.0
    %1011 = vadd.xlane.f32.xlu0 %v1010
    %v1012 = vpop.xlane.xlu0 %1011
    %v1013 = vmul.f32 %v1012, 0.25
    %v1014 = vsub.f32 %v1005, %v1013
    %1016 = vrot.lane.b32.xlu0 %v1014, 127
    %v1017 = vpop.permute.xlu0 %1016
    %1019 = vst.msk [vmem:[#allocation11] sm:$0x3] %vm1009, %v1017
    // Predicated region
    $region50: #{tpu_custom_call.1} parent=1 // pred_check
      _
    $region51: #{tpu_custom_call.1} parent=1 // pred_check_branch
      %1021 = sbr.rel (0) target = $region53
    $region52: #{tpu_custom_call.1} parent=1 // pred_region
      %s1023 = ssub.s32 32, 32
      %1024 = vsyncadd [#allocation5], %s1023
      %s1026 = sshll.u32 [#allocation11], 4
      %s1027 = int_to_ptr.vmem [resolvable:$true] %s1026
      %1029 = dma.vmem_to_hbm [thread:$0]  %s1027, 32, %s8, [#allocation5]
    $region53: #{tpu_custom_call.1} parent=1 // pred_fallthru
      _
    // Predicated region
    $region54: #{tpu_custom_call.1} parent=1 // pred_check
      _
    $region55: #{tpu_custom_call.1} parent=1 // pred_check_branch
      %1031 = sbr.rel (0) target = $region57
    $region56: #{tpu_custom_call.1} parent=1 // pred_region
      %1032 = dma.done [#allocation5], 32
    $region57: #{tpu_custom_call.1} parent=1 // pred_fallthru
      _
    %1033 = vsyncpa [#allocation4], 1
    %1034 = vsyncpa [#allocation7], 1
    %1035 = vsyncpa [#allocation10], 1
    %1036 = vsyncpa [#allocation5], 1

</llo_original>
